<compile_context>
chip_gen: v6e
topology: v6e:2x2x1
jax: 0.10.0
libtpu: 0.0.40
codegen_flags: <defaults>
</compile_context>

<pallas_src>
import jax
import jax.numpy as jnp
from jax.experimental import pallas as pl
from jax.experimental.pallas import tpu as pltpu


def _branch_kernel(x_ref, att_ref, w1_ref, b1_ref, w2_ref, b2_ref, out_ref):
    # x_ref:   (BB, HW, C)   (pre-transposed: contraction dim leads the RHS)
    # att_ref: (BB, M, HW)
    # w1_ref:  (C, HID)      b1_ref: (1, HID)
    # w2_ref:  (HID, NC)     b2_ref: (1, NC)
    # out_ref: (1, BB, NC)
    x_t = x_ref[...]      # (BB, HW, C)
    att = att_ref[...]    # (BB, M, HW)
    hw = x_t.shape[1]

    # Batched masked global-average-pool:
    #   pooled[b, m, c] = mean_h( att[b, m, h] * x[b, c, h] )
    # MXU-native batched (M, HW) @ (HW, C) with f32 accumulation.
    pooled = jnp.einsum(
        "bmh,bhc->bmc", att, x_t,
        preferred_element_type=jnp.float32) * (1.0 / hw)          # (BB, M, C) f32

    # max over the num_maps axis (== max_pool1d with kernel = num_maps).
    max_feature = jnp.max(pooled, axis=1)                          # (BB, C) f32

    # Batched 2-layer MLP over the whole BB block (one MXU pass per layer).
    # Matmul operands follow the weight dtype (f32 or bf16); accumulate in f32;
    # bias adds / ReLU stay f32.
    h = jnp.dot(max_feature.astype(w1_ref.dtype), w1_ref[...],
                preferred_element_type=jnp.float32) + b1_ref[...]  # (BB, HID) f32
    h = jnp.maximum(h, 0.0)
    out = jnp.dot(h.astype(w2_ref.dtype), w2_ref[...],
                  preferred_element_type=jnp.float32) + b2_ref[...]  # (BB, NC) f32
    out_ref[0] = out


def landmarks_attention_branch(x, attention_maps, w1, b1, w2, b2,
                               *, block_b=None, matmul_dtype=jnp.float32):
    """x: (B, C, H, W) f32, attention_maps: (B, M, H, W) f32.

    matmul_dtype: dtype for the big matmul operands (f32 or bf16); all matmuls
                  accumulate in f32 and all elementwise math is f32.
    block_b:      batch elements per grid step. Default keeps 2 grid steps so
                  both v7x TensorCores are busy while still batching the MLP.
    """
    B, C, H, W = x.shape
    _, M, _, _ = attention_maps.shape
    HW = H * W
    HID = w1.shape[1]
    NC = w2.shape[1]

    if block_b is None:
        block_b = max(1, pl.cdiv(B, 2))   # >=2 "parallel" steps when B >= 2
    block_b = max(1, min(block_b, B))
    grid_b = pl.cdiv(B, block_b)
    b_pad = grid_b * block_b

    # Pre-transpose x so the pooling matmul is MXU-native; cast the dominant
    # HBM traffic (x, att) and the weights to the matmul dtype.
    x_t = jnp.swapaxes(x.reshape(B, C, HW), 1, 2).astype(matmul_dtype)   # (B, HW, C)
    att = attention_maps.reshape(B, M, HW).astype(matmul_dtype)          # (B, M, HW)
    if b_pad != B:
        pad = b_pad - B
        x_t = jnp.pad(x_t, ((0, pad), (0, 0), (0, 0)))
        att = jnp.pad(att, ((0, pad), (0, 0), (0, 0)))

    w1c = w1.astype(matmul_dtype)
    w2c = w2.astype(matmul_dtype)
    b1_2d = b1.reshape(1, HID).astype(jnp.float32)
    b2_2d = b2.reshape(1, NC).astype(jnp.float32)

    out = pl.pallas_call(
        _branch_kernel,
        out_shape=jax.ShapeDtypeStruct((grid_b, block_b, NC), jnp.float32),
        grid_spec=pltpu.PrefetchScalarGridSpec(
            num_scalar_prefetch=0,
            grid=(grid_b,),
            in_specs=[
                pl.BlockSpec((block_b, HW, C), lambda g: (g, 0, 0)),
                pl.BlockSpec((block_b, M, HW), lambda g: (g, 0, 0)),
                pl.BlockSpec((C, HID), lambda g: (0, 0)),
                pl.BlockSpec((1, HID), lambda g: (0, 0)),
                pl.BlockSpec((HID, NC), lambda g: (0, 0)),
                pl.BlockSpec((1, NC), lambda g: (0, 0)),
            ],
            out_specs=pl.BlockSpec((1, block_b, NC), lambda g: (g, 0, 0)),
        ),
        compiler_params=pltpu.CompilerParams(
            dimension_semantics=("parallel",)),
    )(x_t, att, w1c, b1_2d, w2c, b2_2d)

    return out.reshape(b_pad, NC)[:B]


def _reference(x, attention_maps, w1, b1, w2, b2):
    """Pure-JAX f32 reference of the (bug-fixed) PyTorch forward."""
    B, C, H, W = x.shape
    M = attention_maps.shape[1]
    feats = []
    for i in range(M):
        att = attention_maps[:, i:i + 1, :, :]          # (B, 1, H, W)
        feat = x * att
        pooled = jnp.mean(feat, axis=(2, 3))            # (B, C)
        feats.append(pooled)
    all_features = jnp.stack(feats, axis=2)             # (B, C, M)
    max_feature = jnp.max(all_features, axis=2)         # (B, C)
    h = jnp.maximum(max_feature @ w1 + b1, 0.0)
    return h @ w2 + b2


if __name__ == "__main__":
    # small shapes consistent with the module:
    # inputdim (= channels) = 32, num_maps = 8, num_classes = 8, hidden = 256
    B, C, H, W = 2, 32, 8, 8
    M = 8            # num_maps
    HID = 256        # fc hidden (fixed by the module)
    NC = 8           # num_classes

    key = jax.random.PRNGKey(0)
    kx, ka, kw1, kb1, kw2, kb2 = jax.random.split(key, 6)

    x = jax.random.normal(kx, (B, C, H, W), dtype=jnp.float32)
    attention_maps = jax.random.uniform(ka, (B, M, H, W), dtype=jnp.float32)

    # deterministic parameter init (stored as (in, out) so kernel does x @ W)
    w1 = jax.random.normal(kw1, (C, HID), dtype=jnp.float32) * 0.05
    b1 = jax.random.normal(kb1, (HID,), dtype=jnp.float32) * 0.01
    w2 = jax.random.normal(kw2, (HID, NC), dtype=jnp.float32) * 0.05
    b2 = jax.random.normal(kb2, (NC,), dtype=jnp.float32) * 0.01

    ref = _reference(x, attention_maps, w1, b1, w2, b2)

    # f32 matmul path: must match the reference tightly.
    out_f32 = landmarks_attention_branch(
        x, attention_maps, w1, b1, w2, b2, matmul_dtype=jnp.float32)
    out_f32 = jax.block_until_ready(out_f32)
    assert out_f32.shape == (B, NC)
    assert jnp.allclose(out_f32, ref, rtol=1e-5, atol=1e-5), "f32 mismatch vs reference"

    # bf16 matmul operands with f32 accumulation (perf path): relaxed tolerance.
    out_bf16 = landmarks_attention_branch(
        x, attention_maps, w1, b1, w2, b2, matmul_dtype=jnp.bfloat16)
    out_bf16 = jax.block_until_ready(out_bf16)
    assert out_bf16.shape == (B, NC)
    assert jnp.allclose(out_bf16, ref, rtol=5e-2, atol=5e-3), "bf16 mismatch vs reference"

    print("KERNEL_OK")
</pallas_src>

<mosaic_0001>
module attributes {stable_mosaic.version = 11 : i64} {
  func.func @_branch_kernel(%arg0: i32, %arg1: memref<1x64x32xf32, #tpu.memory_space<vmem>>, %arg2: memref<1x8x64xf32, #tpu.memory_space<vmem>>, %arg3: memref<32x256xf32, #tpu.memory_space<vmem>>, %arg4: memref<1x256xf32, #tpu.memory_space<vmem>>, %arg5: memref<256x8xf32, #tpu.memory_space<vmem>>, %arg6: memref<1x8xf32, #tpu.memory_space<vmem>>, %arg7: memref<1x1x8xf32, #tpu.memory_space<vmem>>) attributes {dimension_semantics = [#tpu.dimension_semantics<parallel>], iteration_bounds = array<i64: 2>, scalar_prefetch = 0 : i64, scratch_operands = 0 : i64, tpu.core_type = #tpu.core_type<tc>, window_params = [{transform_indices = @transform_0, window_bounds = array<i64: 1, 64, 32>}, {transform_indices = @transform_1, window_bounds = array<i64: 1, 8, 64>}, {pipeline_mode = #tpu.pipeline_mode<synchronous>, transform_indices = @transform_2, window_bounds = array<i64: 32, 256>}, {pipeline_mode = #tpu.pipeline_mode<synchronous>, transform_indices = @transform_3, window_bounds = array<i64: 1, 256>}, {pipeline_mode = #tpu.pipeline_mode<synchronous>, transform_indices = @transform_4, window_bounds = array<i64: 256, 8>}, {pipeline_mode = #tpu.pipeline_mode<synchronous>, transform_indices = @transform_5, window_bounds = array<i64: 1, 8>}, {transform_indices = @transform_6, window_bounds = array<i64: 1, 1, 8>}]} {
    %c0 = arith.constant 0 : index
    %c0_0 = arith.constant 0 : index
    %c0_1 = arith.constant 0 : index
    %0 = vector.load %arg1[%c0, %c0_0, %c0_1] : memref<1x64x32xf32, #tpu.memory_space<vmem>>, vector<1x64x32xf32>
    %c0_2 = arith.constant 0 : index
    %c0_3 = arith.constant 0 : index
    %c0_4 = arith.constant 0 : index
    %1 = vector.load %arg2[%c0_2, %c0_3, %c0_4] : memref<1x8x64xf32, #tpu.memory_space<vmem>>, vector<1x8x64xf32>
    "tpu.trace_start"() <{level = 10 : i32, message = "bmh,bhc->bmc"}> : () -> ()
    %cst = arith.constant dense<0.000000e+00> : vector<1x8x32xf32>
    %2 = tpu.matmul %1, %0, %cst {dimension_numbers = #tpu.dot_dimension_numbers<[2], [1], [1], [2], [0, 0, 0, 1, 1, 2], [0], [0]>} : vector<1x8x64xf32>, vector<1x64x32xf32>, vector<1x8x32xf32> -> vector<1x8x32xf32>
    "tpu.trace_stop"() : () -> ()
    %cst_5 = arith.constant 1.562500e-02 : f32
    %3 = vector.broadcast %cst_5 : f32 to vector<1x8x32xf32>
    %4 = arith.mulf %2, %3 : vector<1x8x32xf32>
    %cst_6 = arith.constant dense<0xFF800000> : vector<1x32xf32>
    %5 = vector.multi_reduction <maximumf>, %4, %cst_6 [1] : vector<1x8x32xf32> to vector<1x32xf32>
    %c0_7 = arith.constant 0 : index
    %c0_8 = arith.constant 0 : index
    %6 = vector.load %arg3[%c0_7, %c0_8] : memref<32x256xf32, #tpu.memory_space<vmem>>, vector<32x256xf32>
    %cst_9 = arith.constant dense<0.000000e+00> : vector<1x256xf32>
    %7 = tpu.matmul %5, %6, %cst_9 {dimension_numbers = #tpu.dot_dimension_numbers<[1], [0], [0], [1], [0, 0, 1, 1], [], []>} : vector<1x32xf32>, vector<32x256xf32>, vector<1x256xf32> -> vector<1x256xf32>
    %c0_10 = arith.constant 0 : index
    %c0_11 = arith.constant 0 : index
    %8 = vector.load %arg4[%c0_10, %c0_11] : memref<1x256xf32, #tpu.memory_space<vmem>>, vector<1x256xf32>
    %9 = arith.addf %7, %8 : vector<1x256xf32>
    %cst_12 = arith.constant 0.000000e+00 : f32
    %10 = vector.broadcast %cst_12 : f32 to vector<1x256xf32>
    %11 = arith.maximumf %9, %10 : vector<1x256xf32>
    %c0_13 = arith.constant 0 : index
    %c0_14 = arith.constant 0 : index
    %12 = vector.load %arg5[%c0_13, %c0_14] : memref<256x8xf32, #tpu.memory_space<vmem>>, vector<256x8xf32>
    %cst_15 = arith.constant dense<0.000000e+00> : vector<1x8xf32>
    %13 = tpu.matmul %11, %12, %cst_15 {dimension_numbers = #tpu.dot_dimension_numbers<[1], [0], [0], [1], [0, 0, 1, 1], [], []>} : vector<1x256xf32>, vector<256x8xf32>, vector<1x8xf32> -> vector<1x8xf32>
    %c0_16 = arith.constant 0 : index
    %c0_17 = arith.constant 0 : index
    %14 = vector.load %arg6[%c0_16, %c0_17] : memref<1x8xf32, #tpu.memory_space<vmem>>, vector<1x8xf32>
    %15 = arith.addf %13, %14 : vector<1x8xf32>
    %c0_18 = arith.constant 0 : index
    %c0_19 = arith.constant 0 : index
    %c0_20 = arith.constant 0 : index
    %16 = vector.load %arg7[%c0_18, %c0_19, %c0_20] : memref<1x1x8xf32, #tpu.memory_space<vmem>>, vector<1x1x8xf32>
    %17 = vector.shape_cast %16 : vector<1x1x8xf32> to vector<1x8xf32>
    %18 = vector.shape_cast %15 : vector<1x8xf32> to vector<1x1x8xf32>
    tpu.vector_store %arg7[%c0_18, %c0_19, %c0_20], %18 {strides = array<i32>} : memref<1x1x8xf32, #tpu.memory_space<vmem>>, vector<1x1x8xf32>,
    return
  }
  func.func @transform_0(%arg0: i32) -> (i32, i32, i32) {
    %c0_i32 = arith.constant 0 : i32
    %c0_i32_0 = arith.constant 0 : i32
    %c0_i32_1 = arith.constant 0 : i32
    return %arg0, %c0_i32, %c0_i32_0 : i32, i32, i32
  }
  func.func @transform_1(%arg0: i32) -> (i32, i32, i32) {
    %c0_i32 = arith.constant 0 : i32
    %c0_i32_0 = arith.constant 0 : i32
    %c0_i32_1 = arith.constant 0 : i32
    return %arg0, %c0_i32, %c0_i32_0 : i32, i32, i32
  }
  func.func @transform_2(%arg0: i32) -> (i32, i32) {
    %c0_i32 = arith.constant 0 : i32
    %c0_i32_0 = arith.constant 0 : i32
    %c0_i32_1 = arith.constant 0 : i32
    return %c0_i32, %c0_i32_0 : i32, i32
  }
  func.func @transform_3(%arg0: i32) -> (i32, i32) {
    %c0_i32 = arith.constant 0 : i32
    %c0_i32_0 = arith.constant 0 : i32
    %c0_i32_1 = arith.constant 0 : i32
    return %c0_i32, %c0_i32_0 : i32, i32
  }
  func.func @transform_4(%arg0: i32) -> (i32, i32) {
    %c0_i32 = arith.constant 0 : i32
    %c0_i32_0 = arith.constant 0 : i32
    %c0_i32_1 = arith.constant 0 : i32
    return %c0_i32, %c0_i32_0 : i32, i32
  }
  func.func @transform_5(%arg0: i32) -> (i32, i32) {
    %c0_i32 = arith.constant 0 : i32
    %c0_i32_0 = arith.constant 0 : i32
    %c0_i32_1 = arith.constant 0 : i32
    return %c0_i32, %c0_i32_0 : i32, i32
  }
  func.func @transform_6(%arg0: i32) -> (i32, i32, i32) {
    %c0_i32 = arith.constant 0 : i32
    %c0_i32_0 = arith.constant 0 : i32
    %c0_i32_1 = arith.constant 0 : i32
    return %arg0, %c0_i32, %c0_i32_0 : i32, i32, i32
  }
}

</mosaic_0001>

<llo_original>
// kernel: tpu_custom_call.1
$region0: #{tpu_custom_call.1}
  #allocation0 [shape = 'u32[]', space=smem, size = 0x4, offset = 0x4, fixed_abs, tag = 'smem constant byte address 0x4 - core index']
  #allocation1 [shape = 'u32[144,128]{1,0:T(1,128)}', space=vmem, size = 0x12000, scoped, tag = 'internal scratch']
  %s0 = inlined_call_operand.vmem [shape: f32[2,64,32], index: 0, kind: input, shape index: {}]
  %s1 = inlined_call_operand.vmem [shape: f32[2,8,64], index: 1, kind: input, shape index: {}]
  %s2 = inlined_call_operand.vmem [shape: f32[32,256], index: 2, kind: input, shape index: {}]
  %s3 = inlined_call_operand.vmem [shape: f32[1,256], index: 3, kind: input, shape index: {}]
  %s4 = inlined_call_operand.vmem [shape: f32[256,8], index: 4, kind: input, shape index: {}]
  %s5 = inlined_call_operand.vmem [shape: f32[1,8], index: 5, kind: input, shape index: {}]
  %s6 = inlined_call_operand.hbm [shape: f32[2,1,8], index: 6, kind: output, shape index: {}]
  %s7 = sld [smem:[#allocation0]]
  $region57: #{tpu_custom_call.1} parent=0
    _
  %s9 = ssub.s32 1, %s7
  %s10 = scalar_select 0, %s9, %s7
  $region1: #{tpu_custom_call.1} parent=0
    #allocation2 [shape = 'u8[1024]{0}', space=vmem, size = 0x400, scoped, tag = 'output window, operand 0']
    #allocation3 [shape = 's32[2]{0}', space=sflag, size = 0x8, scoped, tag = 'scoped memory for tpu_custom_call.1']
    %11 = vsyncpa [#allocation3], 0
    %s12 = scalar_lea.sflag [#allocation3], 1
    %13 = vsyncpa %s12, 0
    loop: start=0, step=1, limit=4
    $region2: #{tpu_custom_call.1} parent=1 // loop_pre_header
      _
    $region3: #{tpu_custom_call.1} parent=1 // loop_header
      %s15 = sphi 0, %s19
      %p16 = scmp.ge.s32.totalorder %s15, 4
      %s25 = sphi 0, %s27
      %s28 = sphi 0, %s25
      %s29 = sphi 0, %s28
      %s45 = sphi 0, %s29
      %s51 = sphi 0, %s53
      %s54 = sphi 0, %s51
      %s55 = sphi 0, %s54
      %s71 = sphi 0, %s55
      %s75 = sphi 0, %s75
      %s77 = sphi 0, %s75
      %s78 = sphi 0, %s77
      %s92 = sphi 0, %s78
      %s96 = sphi 0, %s96
      %s98 = sphi 0, %s96
      %s99 = sphi 0, %s98
      %s113 = sphi 0, %s99
      %s117 = sphi 0, %s117
      %s119 = sphi 0, %s117
      %s120 = sphi 0, %s119
      %s134 = sphi 0, %s120
      %s138 = sphi 0, %s138
      %s140 = sphi 0, %s138
      %s141 = sphi 0, %s140
      %s155 = sphi 0, %s141
      %s161 = sphi 0, %s163
      %s164 = sphi 0, %s161
      %s165 = sphi 0, %s164
      %s181 = sphi 0, %s165
    $region4: #{tpu_custom_call.1} parent=1 // loop_header_branch
      %18 = sbr.rel (%p16) target = $region8
    $region5: #{tpu_custom_call.1} parent=1 // loop_body
      %s20 = ssub.s32 %s15, 1
      %s21 = ssub.s32 %s15, 2
      %s22 = sadd.s32 %s15, 1
      %s23 = ssub.s32 %s15, %s22
      %p24 = scmp.eq.s32.totalorder %s23, 0
      %s26 = sadd.s32 %s25, 1
      %s27 = scalar_select %p24, %s25, %s26
      %p30 = pneg %p24
      %p31 = scmp.eq.s32.totalorder %s15, 1
      %p32 = por %p30, %p31
      %p33 = scmp.ne.s32.totalorder %s25, %s28
      %p34 = scmp.eq.s32.totalorder %s15, 0
      %p35 = por %p33, %p34
      %p36 = scmp.ne.s32.totalorder %s25, %s28
      %p37 = scmp.eq.s32.totalorder %s20, 1
      %p38 = por %p36, %p37
      %p39 = scmp.ne.s32.totalorder %s28, %s29
      %p40 = scmp.eq.s32.totalorder %s20, 0
      %p41 = por %p39, %p40
      %p42 = scmp.ne.s32.totalorder %s28, %s29
      %p43 = scmp.eq.s32.totalorder %s21, 1
      %p44 = por %p42, %p43
      %p46 = scmp.ne.s32.totalorder %s29, %s45
      %p47 = scmp.eq.s32.totalorder %s21, 0
      %p48 = por %p46, %p47
      %s49 = ssub.s32 %s15, %s22
      %p50 = scmp.eq.s32.totalorder %s49, 0
      %s52 = sadd.s32 %s51, 1
      %s53 = scalar_select %p50, %s51, %s52
      %p56 = pneg %p50
      %p57 = scmp.eq.s32.totalorder %s15, 1
      %p58 = por %p56, %p57
      %p59 = scmp.ne.s32.totalorder %s51, %s54
      %p60 = scmp.eq.s32.totalorder %s15, 0
      %p61 = por %p59, %p60
      %p62 = scmp.ne.s32.totalorder %s51, %s54
      %p63 = scmp.eq.s32.totalorder %s20, 1
      %p64 = por %p62, %p63
      %p65 = scmp.ne.s32.totalorder %s54, %s55
      %p66 = scmp.eq.s32.totalorder %s20, 0
      %p67 = por %p65, %p66
      %p68 = scmp.ne.s32.totalorder %s54, %s55
      %p69 = scmp.eq.s32.totalorder %s21, 1
      %p70 = por %p68, %p69
      %p72 = scmp.ne.s32.totalorder %s55, %s71
      %p73 = scmp.eq.s32.totalorder %s21, 0
      %p74 = por %p72, %p73
      %s76 = sadd.s32 %s75, 1
      %p79 = scmp.eq.s32.totalorder %s15, 1
      %p80 = scmp.ne.s32.totalorder %s75, %s77
      %p81 = scmp.eq.s32.totalorder %s15, 0
      %p82 = por %p80, %p81
      %p83 = scmp.ne.s32.totalorder %s75, %s77
      %p84 = scmp.eq.s32.totalorder %s20, 1
      %p85 = por %p83, %p84
      %p86 = scmp.ne.s32.totalorder %s77, %s78
      %p87 = scmp.eq.s32.totalorder %s20, 0
      %p88 = por %p86, %p87
      %p89 = scmp.ne.s32.totalorder %s77, %s78
      %p90 = scmp.eq.s32.totalorder %s21, 1
      %p91 = por %p89, %p90
      %p93 = scmp.ne.s32.totalorder %s78, %s92
      %p94 = scmp.eq.s32.totalorder %s21, 0
      %p95 = por %p93, %p94
      %s97 = sadd.s32 %s96, 1
      %p100 = scmp.eq.s32.totalorder %s15, 1
      %p101 = scmp.ne.s32.totalorder %s96, %s98
      %p102 = scmp.eq.s32.totalorder %s15, 0
      %p103 = por %p101, %p102
      %p104 = scmp.ne.s32.totalorder %s96, %s98
      %p105 = scmp.eq.s32.totalorder %s20, 1
      %p106 = por %p104, %p105
      %p107 = scmp.ne.s32.totalorder %s98, %s99
      %p108 = scmp.eq.s32.totalorder %s20, 0
      %p109 = por %p107, %p108
      %p110 = scmp.ne.s32.totalorder %s98, %s99
      %p111 = scmp.eq.s32.totalorder %s21, 1
      %p112 = por %p110, %p111
      %p114 = scmp.ne.s32.totalorder %s99, %s113
      %p115 = scmp.eq.s32.totalorder %s21, 0
      %p116 = por %p114, %p115
      %s118 = sadd.s32 %s117, 1
      %p121 = scmp.eq.s32.totalorder %s15, 1
      %p122 = scmp.ne.s32.totalorder %s117, %s119
      %p123 = scmp.eq.s32.totalorder %s15, 0
      %p124 = por %p122, %p123
      %p125 = scmp.ne.s32.totalorder %s117, %s119
      %p126 = scmp.eq.s32.totalorder %s20, 1
      %p127 = por %p125, %p126
      %p128 = scmp.ne.s32.totalorder %s119, %s120
      %p129 = scmp.eq.s32.totalorder %s20, 0
      %p130 = por %p128, %p129
      %p131 = scmp.ne.s32.totalorder %s119, %s120
      %p132 = scmp.eq.s32.totalorder %s21, 1
      %p133 = por %p131, %p132
      %p135 = scmp.ne.s32.totalorder %s120, %s134
      %p136 = scmp.eq.s32.totalorder %s21, 0
      %p137 = por %p135, %p136
      %s139 = sadd.s32 %s138, 1
      %p142 = scmp.eq.s32.totalorder %s15, 1
      %p143 = scmp.ne.s32.totalorder %s138, %s140
      %p144 = scmp.eq.s32.totalorder %s15, 0
      %p145 = por %p143, %p144
      %p146 = scmp.ne.s32.totalorder %s138, %s140
      %p147 = scmp.eq.s32.totalorder %s20, 1
      %p148 = por %p146, %p147
      %p149 = scmp.ne.s32.totalorder %s140, %s141
      %p150 = scmp.eq.s32.totalorder %s20, 0
      %p151 = por %p149, %p150
      %p152 = scmp.ne.s32.totalorder %s140, %s141
      %p153 = scmp.eq.s32.totalorder %s21, 1
      %p154 = por %p152, %p153
      %p156 = scmp.ne.s32.totalorder %s141, %s155
      %p157 = scmp.eq.s32.totalorder %s21, 0
      %p158 = por %p156, %p157
      %s159 = ssub.s32 %s15, %s22
      %p160 = scmp.eq.s32.totalorder %s159, 0
      %s162 = sadd.s32 %s161, 1
      %s163 = scalar_select %p160, %s161, %s162
      %p166 = pneg %p160
      %p167 = scmp.eq.s32.totalorder %s15, 1
      %p168 = por %p166, %p167
      %p169 = scmp.ne.s32.totalorder %s161, %s164
      %p170 = scmp.eq.s32.totalorder %s15, 0
      %p171 = por %p169, %p170
      %p172 = scmp.ne.s32.totalorder %s161, %s164
      %p173 = scmp.eq.s32.totalorder %s20, 1
      %p174 = por %p172, %p173
      %p175 = scmp.ne.s32.totalorder %s164, %s165
      %p176 = scmp.eq.s32.totalorder %s20, 0
      %p177 = por %p175, %p176
      %p178 = scmp.ne.s32.totalorder %s164, %s165
      %p179 = scmp.eq.s32.totalorder %s21, 1
      %p180 = por %p178, %p179
      %p182 = scmp.ne.s32.totalorder %s165, %s181
      %p183 = scmp.eq.s32.totalorder %s21, 0
      %p184 = por %p182, %p183
      %p185 = scmp.le.s32.totalorder 1, %s15
      %p186 = scmp.lt.s32.totalorder %s15, 3
      %p187 = pnand %p185, %p186
      %p188 = pneg %p187
      // Predicated region
      $region9: #{tpu_custom_call.1} parent=5 // pred_check
        _
      $region10: #{tpu_custom_call.1} parent=5 // pred_check_branch
        %190 = sbr.rel (%p187) target = $region12
      $region11: #{tpu_custom_call.1} parent=5 // pred_region
        %s191 = ssub.s32 %s15, 1
        // Predicated region
        $region13: #{tpu_custom_call.1} parent=11 // pred_check
          %p192 = pneg %p88
        $region14: #{tpu_custom_call.1} parent=11 // pred_check_branch
          %194 = sbr.rel (%p192) target = $region16
        $region15: #{tpu_custom_call.1} parent=11 // pred_region
          _
        $region16: #{tpu_custom_call.1} parent=11 // pred_fallthru
          _
        // Predicated region
        $region17: #{tpu_custom_call.1} parent=11 // pred_check
          %p195 = pneg %p109
        $region18: #{tpu_custom_call.1} parent=11 // pred_check_branch
          %197 = sbr.rel (%p195) target = $region20
        $region19: #{tpu_custom_call.1} parent=11 // pred_region
          _
        $region20: #{tpu_custom_call.1} parent=11 // pred_fallthru
          _
        // Predicated region
        $region21: #{tpu_custom_call.1} parent=11 // pred_check
          %p198 = pneg %p130
        $region22: #{tpu_custom_call.1} parent=11 // pred_check_branch
          %200 = sbr.rel (%p198) target = $region24
        $region23: #{tpu_custom_call.1} parent=11 // pred_region
          _
        $region24: #{tpu_custom_call.1} parent=11 // pred_fallthru
          _
        // Predicated region
        $region25: #{tpu_custom_call.1} parent=11 // pred_check
          %p201 = pneg %p151
        $region26: #{tpu_custom_call.1} parent=11 // pred_check_branch
          %203 = sbr.rel (%p201) target = $region28
        $region27: #{tpu_custom_call.1} parent=11 // pred_region
          _
        $region28: #{tpu_custom_call.1} parent=11 // pred_fallthru
          _
      $region12: #{tpu_custom_call.1} parent=5 // pred_fallthru
        _
      %p204 = scmp.lt.s32.totalorder %s15, 2
      // Predicated region
      $region29: #{tpu_custom_call.1} parent=5 // pred_check
        %p205 = pneg %p204
      $region30: #{tpu_custom_call.1} parent=5 // pred_check_branch
        %207 = sbr.rel (%p205) target = $region32
      $region31: #{tpu_custom_call.1} parent=5 // pred_region
        // Predicated region
        $region33: #{tpu_custom_call.1} parent=31 // pred_check
          %p208 = pneg %p35
        $region34: #{tpu_custom_call.1} parent=31 // pred_check_branch
          %210 = sbr.rel (%p208) target = $region36
        $region35: #{tpu_custom_call.1} parent=31 // pred_region
          %p211 = scmp.lt.s32.totalorder %s15, 1
          %s212 = scalar_select %p211, %s15, 1
          %s213 = smul.addr %s212, 8
          %s214 = smul.addr %s213, 8
          %s215 = scalar_lea.vmem %s0, %s214
        $region36: #{tpu_custom_call.1} parent=31 // pred_fallthru
          _
        // Predicated region
        $region37: #{tpu_custom_call.1} parent=31 // pred_check
          %p216 = pneg %p61
        $region38: #{tpu_custom_call.1} parent=31 // pred_check_branch
          %218 = sbr.rel (%p216) target = $region40
        $region39: #{tpu_custom_call.1} parent=31 // pred_region
          %p219 = scmp.lt.s32.totalorder %s15, 1
          %s220 = scalar_select %p219, %s15, 1
          %s221 = smul.addr %s220, 8
          %s222 = scalar_lea.vmem %s1, %s221
        $region40: #{tpu_custom_call.1} parent=31 // pred_fallthru
          _
      $region32: #{tpu_custom_call.1} parent=5 // pred_fallthru
        _
      %p223 = scmp.le.s32.totalorder 1, %s15
      %p224 = scmp.lt.s32.totalorder %s15, 3
      %p225 = pnand %p223, %p224
      %p226 = pneg %p225
      // Predicated region
      $region41: #{tpu_custom_call.1} parent=5 // pred_check
        _
      $region42: #{tpu_custom_call.1} parent=5 // pred_check_branch
        %228 = sbr.rel (%p225) target = $region44
      $region43: #{tpu_custom_call.1} parent=5 // pred_region
        %s229 = ssub.s32 %s15, 1
        %p230 = scmp.lt.s32.totalorder %s20, 1
        %s231 = scalar_select %p230, %s20, 1
        %s232 = smul.addr %s231, 8
        %s233 = smul.addr %s232, 8
        %s234 = scalar_lea.vmem %s0, %s233
        %p235 = pneg %p41
        %p236 = pneg %p38
        %p237 = scmp.lt.s32.totalorder %s20, 1
        %s238 = scalar_select %p237, %s20, 1
        %s239 = smul.addr %s238, 8
        %s240 = scalar_lea.vmem %s1, %s239
        %p241 = pneg %p67
        %p242 = pneg %p64
        %p243 = pneg %p88
        %p244 = pneg %p85
        %p245 = pneg %p109
        %p246 = pneg %p106
        %p247 = pneg %p130
        %p248 = pneg %p127
        %p249 = pneg %p151
        %p250 = pneg %p148
        %p251 = pneg %p177
        %p252 = pneg %p174
        %s253 = sand.u32 %s164, 1
        %s254 = scalar_lea.sflag [#allocation3], %s253
        %s255 = sand.u32 %s164, 1
        %s256 = scalar_lea.vmem [#allocation2], %s255
        %p257 = scmp.lt.s32.totalorder %s20, 1
        %s258 = scalar_select %p257, %s20, 1
        %s259 = smul.addr %s258, 8
        %s260 = smul.addr %s259, 8
        %s261 = scalar_lea.vmem %s0, %s260
        %p262 = scmp.lt.s32.totalorder %s20, 1
        %s263 = scalar_select %p262, %s20, 1
        %s264 = smul.addr %s263, 8
        %s265 = scalar_lea.vmem %s1, %s264
        %v266 = vld [vmem:[%s261] sm:$0xff]
        %v267 = vld [vmem:[%s261 + $0x8] sm:$0xff]
        %v268 = vld [vmem:[%s261 + $0x10] sm:$0xff]
        %v269 = vld [vmem:[%s261 + $0x18] sm:$0xff]
        %v270 = vld [vmem:[%s261 + $0x20] sm:$0xff]
        %v271 = vld [vmem:[%s261 + $0x28] sm:$0xff]
        %v272 = vld [vmem:[%s261 + $0x30] sm:$0xff]
        %v273 = vld [vmem:[%s261 + $0x38] sm:$0xff]
        %v274 = vld [vmem:[%s265] sm:$0xff]
        %vm275 = vcmask 523264
        %v277 = vsel %vm275, %v274, 0
        %279 = vmatprep.subr.mxu0 0.0
        %280 = vmatpush1.msra.mxu0 0.0
        %281 = vmatprep.subr.mxu0 0.0
        %282 = vmatpush1.msra.mxu0 0.0
        %283 = vmatprep.subr.mxu0 0.0
        %284 = vmatpush1.msra.mxu0 0.0
        %285 = vmatprep.subr.mxu0 0.0
        %286 = vmatpush1.msra.mxu0 0.0
        %287 = vmatprep.subr.mxu0 0.0
        %288 = vmatpush1.msra.mxu0 0.0
        %289 = vmatprep.subr.mxu0 0.0
        %290 = vmatpush1.msra.mxu0 0.0
        %291 = vmatprep.subr.mxu0 0.0
        %292 = vmatpush1.msra.mxu0 0.0
        %293 = vmatprep.subr.mxu0 0.0
        %294 = vmatpush1.msra.mxu0 0.0
        %295 = vmatprep.subr.mxu0 0.0
        %296 = vmatpush1.msra.mxu0 %v273
        %297 = vmatprep.subr.mxu0 0.0
        %298 = vmatpush1.msra.mxu0 %v272
        %299 = vmatprep.subr.mxu0 0.0
        %300 = vmatpush1.msra.mxu0 %v271
        %301 = vmatprep.subr.mxu0 0.0
        %302 = vmatpush1.msra.mxu0 %v270
        %303 = vmatprep.subr.mxu0 0.0
        %304 = vmatpush1.msra.mxu0 %v269
        %305 = vmatprep.subr.mxu0 0.0
        %306 = vmatpush1.msra.mxu0 %v268
        %307 = vmatprep.subr.mxu0 0.0
        %308 = vmatpush1.msra.mxu0 %v267
        %309 = vmatprep.subr.mxu0 0.0
        %310 = vmatpush1.msra.mxu0 %v266
        %311 = vmatprep.subr.mxu0 0.0
        %312 = vmatpush2.msra.mxu0 0.0
        %313 = vmatprep.subr.mxu0 0.0
        %314 = vmatpush2.msra.mxu0 0.0
        %315 = vmatprep.subr.mxu0 0.0
        %316 = vmatpush2.msra.mxu0 0.0
        %317 = vmatprep.subr.mxu0 0.0
        %318 = vmatpush2.msra.mxu0 0.0
        %319 = vmatprep.subr.mxu0 0.0
        %320 = vmatpush2.msra.mxu0 0.0
        %321 = vmatprep.subr.mxu0 0.0
        %322 = vmatpush2.msra.mxu0 0.0
        %323 = vmatprep.subr.mxu0 0.0
        %324 = vmatpush2.msra.mxu0 0.0
        %325 = vmatprep.subr.mxu0 0.0
        %326 = vmatpush2.msra.mxu0 0.0
        %327 = vmatprep.subr.mxu0 0.0
        %328 = vmatpush2.msra.mxu0 0.0
        %329 = vmatprep.subr.mxu0 0.0
        %330 = vmatpush2.msra.mxu0 0.0
        %331 = vmatprep.subr.mxu0 0.0
        %332 = vmatpush2.msra.mxu0 0.0
        %333 = vmatprep.subr.mxu0 0.0
        %334 = vmatpush2.msra.mxu0 0.0
        %335 = vmatprep.subr.mxu0 0.0
        %336 = vmatpush2.msra.mxu0 0.0
        %337 = vmatprep.subr.mxu0 0.0
        %338 = vmatpush2.msra.mxu0 0.0
        %339 = vmatprep.subr.mxu0 0.0
        %340 = vmatpush2.msra.mxu0 0.0
        %341 = vmatprep.subr.mxu0 0.0
        %342 = vmatpush2.msra.mxu0 0.0
        %343 = vmatprep.mubr.f32.mxu0 0.0
        %344 = vmatmul.mubr.f32.gmra.mxu0 %v277
        %v345 = vpop.f32.mrf.mxu0
        %v346 = vadd.f32 0.0, %v345
        %v347 = vpop.f32.mrf.mxu0
        %348 = vdwg.mxu0
        %v349 = vmul.f32 %v346, 0.015625
        %vm350 = vcmask 261120
        %v351 = vsel %vm350, %v349, -inf
        %v352 = vrot.slane %v351, 4
        %v353 = vmax.f32 %v351, %v352
        %v354 = vrot.slane %v353, 2
        %v355 = vmax.f32 %v353, %v354
        %v356 = vrot.slane %v355, 1
        %v357 = vmax.f32 %v355, %v356
        %v358 = vld [vmem:[%s2] sm:$0xff]
        %v359 = vld [vmem:[%s2 + $0x8] sm:$0xff]
        %v360 = vld [vmem:[%s2 + $0x10] sm:$0xff]
        %v361 = vld [vmem:[%s2 + $0x18] sm:$0xff]
        %v362 = vld [vmem:[%s2 + $0x20] sm:$0xff]
        %v363 = vld [vmem:[%s2 + $0x28] sm:$0xff]
        %v364 = vld [vmem:[%s2 + $0x30] sm:$0xff]
        %v365 = vld [vmem:[%s2 + $0x38] sm:$0xff]
        %v366 = vld [vmem:[%s3] sm:$0x3]
        %v368 = vlaneseq
        %v369 = vshrl.u32 %v368, 7
        %v370 = vsub.s32 0, %v369
        %v371 = vrot.slane %v366, %v370
        %v372 = vlaneseq
        %v373 = vshrl.u32 %v372, 7
        %v374 = vsub.s32 1, %v373
        %v375 = vrot.slane %v366, %v374
        %v379 = vsel %vm350, %v357, 0
        %381 = vmatprep.subr.mxu0 0.0
        %382 = vmatpush1.msra.mxu0 0.0
        %383 = vmatprep.subr.mxu0 0.0
        %384 = vmatpush1.msra.mxu0 0.0
        %385 = vmatprep.subr.mxu0 0.0
        %386 = vmatpush1.msra.mxu0 0.0
        %387 = vmatprep.subr.mxu0 0.0
        %388 = vmatpush1.msra.mxu0 0.0
        %389 = vmatprep.subr.mxu0 0.0
        %390 = vmatpush1.msra.mxu0 0.0
        %391 = vmatprep.subr.mxu0 0.0
        %392 = vmatpush1.msra.mxu0 0.0
        %393 = vmatprep.subr.mxu0 0.0
        %394 = vmatpush1.msra.mxu0 0.0
        %395 = vmatprep.subr.mxu0 0.0
        %396 = vmatpush1.msra.mxu0 0.0
        %397 = vmatprep.subr.mxu0 0.0
        %398 = vmatpush1.msra.mxu0 0.0
        %399 = vmatprep.subr.mxu0 0.0
        %400 = vmatpush1.msra.mxu0 0.0
        %401 = vmatprep.subr.mxu0 0.0
        %402 = vmatpush1.msra.mxu0 0.0
        %403 = vmatprep.subr.mxu0 0.0
        %404 = vmatpush1.msra.mxu0 0.0
        %405 = vmatprep.subr.mxu0 %v365
        %406 = vmatpush1.msra.mxu0 %v364
        %407 = vmatprep.subr.mxu0 %v363
        %408 = vmatpush1.msra.mxu0 %v362
        %409 = vmatprep.subr.mxu0 %v361
        %410 = vmatpush1.msra.mxu0 %v360
        %411 = vmatprep.subr.mxu0 %v359
        %412 = vmatpush1.msra.mxu0 %v358
        %413 = vmatprep.subr.mxu0 0.0
        %414 = vmatpush2.msra.mxu0 0.0
        %415 = vmatprep.subr.mxu0 0.0
        %416 = vmatpush2.msra.mxu0 0.0
        %417 = vmatprep.subr.mxu0 0.0
        %418 = vmatpush2.msra.mxu0 0.0
        %419 = vmatprep.subr.mxu0 0.0
        %420 = vmatpush2.msra.mxu0 0.0
        %421 = vmatprep.subr.mxu0 0.0
        %422 = vmatpush2.msra.mxu0 0.0
        %423 = vmatprep.subr.mxu0 0.0
        %424 = vmatpush2.msra.mxu0 0.0
        %425 = vmatprep.subr.mxu0 0.0
        %426 = vmatpush2.msra.mxu0 0.0
        %427 = vmatprep.subr.mxu0 0.0
        %428 = vmatpush2.msra.mxu0 0.0
        %429 = vmatprep.subr.mxu0 0.0
        %430 = vmatpush2.msra.mxu0 0.0
        %431 = vmatprep.subr.mxu0 0.0
        %432 = vmatpush2.msra.mxu0 0.0
        %433 = vmatprep.subr.mxu0 0.0
        %434 = vmatpush2.msra.mxu0 0.0
        %435 = vmatprep.subr.mxu0 0.0
        %436 = vmatpush2.msra.mxu0 0.0
        %437 = vmatprep.subr.mxu0 0.0
        %438 = vmatpush2.msra.mxu0 0.0
        %439 = vmatprep.subr.mxu0 0.0
        %440 = vmatpush2.msra.mxu0 0.0
        %441 = vmatprep.subr.mxu0 0.0
        %442 = vmatpush2.msra.mxu0 0.0
        %443 = vmatprep.subr.mxu0 0.0
        %444 = vmatpush2.msra.mxu0 0.0
        %445 = vmatprep.mubr.f32.mxu0 0.0
        %446 = vmatmul.mubr.f32.gmra.mxu0 %v379
        %v447 = vpop.f32.mrf.mxu0
        %v448 = vadd.f32 %v371, %v447
        %v449 = vpop.f32.mrf.mxu0
        %v450 = vadd.f32 %v375, %v449
        %451 = vdwg.mxu0
        %v452 = vmax.f32 %v448, 0.0
        %v453 = vmax.f32 %v450, 0.0
        %v454 = vld [vmem:[%s4] sm:$0xff]
        %v455 = vld [vmem:[%s4 + $0x8] sm:$0xff]
        %v456 = vld [vmem:[%s4 + $0x10] sm:$0xff]
        %v457 = vld [vmem:[%s4 + $0x18] sm:$0xff]
        %v458 = vld [vmem:[%s4 + $0x20] sm:$0xff]
        %v459 = vld [vmem:[%s4 + $0x28] sm:$0xff]
        %v460 = vld [vmem:[%s4 + $0x30] sm:$0xff]
        %v461 = vld [vmem:[%s4 + $0x38] sm:$0xff]
        %v462 = vld [vmem:[%s4 + $0x40] sm:$0xff]
        %v463 = vld [vmem:[%s4 + $0x48] sm:$0xff]
        %v464 = vld [vmem:[%s4 + $0x50] sm:$0xff]
        %v465 = vld [vmem:[%s4 + $0x58] sm:$0xff]
        %v466 = vld [vmem:[%s4 + $0x60] sm:$0xff]
        %v467 = vld [vmem:[%s4 + $0x68] sm:$0xff]
        %v468 = vld [vmem:[%s4 + $0x70] sm:$0xff]
        %v469 = vld [vmem:[%s4 + $0x78] sm:$0xff]
        %v470 = vld [vmem:[%s4 + $0x80] sm:$0xff]
        %v471 = vld [vmem:[%s4 + $0x88] sm:$0xff]
        %v472 = vld [vmem:[%s4 + $0x90] sm:$0xff]
        %v473 = vld [vmem:[%s4 + $0x98] sm:$0xff]
        %v474 = vld [vmem:[%s4 + $0xa0] sm:$0xff]
        %v475 = vld [vmem:[%s4 + $0xa8] sm:$0xff]
        %v476 = vld [vmem:[%s4 + $0xb0] sm:$0xff]
        %v477 = vld [vmem:[%s4 + $0xb8] sm:$0xff]
        %v478 = vld [vmem:[%s4 + $0xc0] sm:$0xff]
        %v479 = vld [vmem:[%s4 + $0xc8] sm:$0xff]
        %v480 = vld [vmem:[%s4 + $0xd0] sm:$0xff]
        %v481 = vld [vmem:[%s4 + $0xd8] sm:$0xff]
        %v482 = vld [vmem:[%s4 + $0xe0] sm:$0xff]
        %v483 = vld [vmem:[%s4 + $0xe8] sm:$0xff]
        %v484 = vld [vmem:[%s4 + $0xf0] sm:$0xff]
        %v485 = vld [vmem:[%s4 + $0xf8] sm:$0xff]
        %v486 = vld [vmem:[%s5] sm:$0x1]
        %487 = vmatprep.subr.mxu0 0.0
        %488 = vmatpush1.msra.mxu0 %v469
        %489 = vmatprep.subr.mxu0 0.0
        %490 = vmatpush1.msra.mxu0 %v468
        %491 = vmatprep.subr.mxu0 0.0
        %492 = vmatpush1.msra.mxu0 %v467
        %493 = vmatprep.subr.mxu0 0.0
        %494 = vmatpush1.msra.mxu0 %v466
        %495 = vmatprep.subr.mxu0 0.0
        %496 = vmatpush1.msra.mxu0 %v465
        %497 = vmatprep.subr.mxu0 0.0
        %498 = vmatpush1.msra.mxu0 %v464
        %499 = vmatprep.subr.mxu0 0.0
        %500 = vmatpush1.msra.mxu0 %v463
        %501 = vmatprep.subr.mxu0 0.0
        %502 = vmatpush1.msra.mxu0 %v462
        %503 = vmatprep.subr.mxu0 0.0
        %504 = vmatpush1.msra.mxu0 %v461
        %505 = vmatprep.subr.mxu0 0.0
        %506 = vmatpush1.msra.mxu0 %v460
        %507 = vmatprep.subr.mxu0 0.0
        %508 = vmatpush1.msra.mxu0 %v459
        %509 = vmatprep.subr.mxu0 0.0
        %510 = vmatpush1.msra.mxu0 %v458
        %511 = vmatprep.subr.mxu0 0.0
        %512 = vmatpush1.msra.mxu0 %v457
        %513 = vmatprep.subr.mxu0 0.0
        %514 = vmatpush1.msra.mxu0 %v456
        %515 = vmatprep.subr.mxu0 0.0
        %516 = vmatpush1.msra.mxu0 %v455
        %517 = vmatprep.subr.mxu0 0.0
        %518 = vmatpush1.msra.mxu0 %v454
        %519 = vmatprep.subr.mxu0 0.0
        %520 = vmatpush2.msra.mxu0 %v485
        %521 = vmatprep.subr.mxu0 0.0
        %522 = vmatpush2.msra.mxu0 %v484
        %523 = vmatprep.subr.mxu0 0.0
        %524 = vmatpush2.msra.mxu0 %v483
        %525 = vmatprep.subr.mxu0 0.0
        %526 = vmatpush2.msra.mxu0 %v482
        %527 = vmatprep.subr.mxu0 0.0
        %528 = vmatpush2.msra.mxu0 %v481
        %529 = vmatprep.subr.mxu0 0.0
        %530 = vmatpush2.msra.mxu0 %v480
        %531 = vmatprep.subr.mxu0 0.0
        %532 = vmatpush2.msra.mxu0 %v479
        %533 = vmatprep.subr.mxu0 0.0
        %534 = vmatpush2.msra.mxu0 %v478
        %535 = vmatprep.subr.mxu0 0.0
        %536 = vmatpush2.msra.mxu0 %v477
        %537 = vmatprep.subr.mxu0 0.0
        %538 = vmatpush2.msra.mxu0 %v476
        %539 = vmatprep.subr.mxu0 0.0
        %540 = vmatpush2.msra.mxu0 %v475
        %541 = vmatprep.subr.mxu0 0.0
        %542 = vmatpush2.msra.mxu0 %v474
        %543 = vmatprep.subr.mxu0 0.0
        %544 = vmatpush2.msra.mxu0 %v473
        %545 = vmatprep.subr.mxu0 0.0
        %546 = vmatpush2.msra.mxu0 %v472
        %547 = vmatprep.subr.mxu0 0.0
        %548 = vmatpush2.msra.mxu0 %v471
        %549 = vmatprep.subr.mxu0 0.0
        %550 = vmatpush2.msra.mxu0 %v470
        %551 = vmatprep.mubr.f32.mxu0 %v453
        %552 = vmatmul.mubr.f32.gmra.mxu0 %v452
        %v553 = vpop.f32.mrf.mxu0
        %v554 = vadd.f32 %v486, %v553
        %v555 = vpop.f32.mrf.mxu0
        %556 = vdwg.mxu0
        %vm557 = vcmask 57344
        %558 = vst.msk [vmem:[%s256] sm:$0x1] %vm557, %v554
        %s559 = sand.u32 %s164, 1
        %s560 = scalar_lea.sflag [#allocation3], %s559
        %s561 = sand.u32 %s164, 1
        %s562 = scalar_lea.vmem [#allocation2], %s561
        // Predicated region
        $region45: #{tpu_custom_call.1} parent=43 // pred_check
          %p563 = pneg %p174
        $region46: #{tpu_custom_call.1} parent=43 // pred_check_branch
          %565 = sbr.rel (%p563) target = $region48
        $region47: #{tpu_custom_call.1} parent=43 // pred_region
          %s567 = ssub.s32 16, 16
          %568 = vsyncadd %s560, %s567
          %s569 = smul.addr %s20, 16
          %s570 = scalar_lea.hbm %s6, %s569
          %s572 = sshll.u32 %s562, 4
          %s573 = int_to_ptr.vmem [resolvable:$true] %s572
          %575 = dma.vmem_to_hbm [thread:$0]  %s573, 16, %s570, %s560
        $region48: #{tpu_custom_call.1} parent=43 // pred_fallthru
          _
      $region44: #{tpu_custom_call.1} parent=5 // pred_fallthru
        _
      %p576 = scmp.le.s32.totalorder 2, %s15
      // Predicated region
      $region49: #{tpu_custom_call.1} parent=5 // pred_check
        %p577 = pneg %p576
      $region50: #{tpu_custom_call.1} parent=5 // pred_check_branch
        %579 = sbr.rel (%p577) target = $region52
      $region51: #{tpu_custom_call.1} parent=5 // pred_region
        %s580 = ssub.s32 %s15, 2
        // Predicated region
        $region53: #{tpu_custom_call.1} parent=51 // pred_check
          %p581 = pneg %p180
        $region54: #{tpu_custom_call.1} parent=51 // pred_check_branch
          %583 = sbr.rel (%p581) target = $region56
        $region55: #{tpu_custom_call.1} parent=51 // pred_region
          %s584 = sand.u32 %s165, 1
          %s585 = scalar_lea.sflag [#allocation3], %s584
          %s586 = sand.u32 %s165, 1
          %s587 = scalar_lea.vmem [#allocation2], %s586
          %588 = dma.done %s585, 16
        $region56: #{tpu_custom_call.1} parent=51 // pred_fallthru
          _
      $region52: #{tpu_custom_call.1} parent=5 // pred_fallthru
        _
    $region6: #{tpu_custom_call.1} parent=1 // loop_footer
      %s19 = sadd.s32 1, %s15
    $region7: #{tpu_custom_call.1} parent=1 // loop_footer_branch
      %14 = sbr.rel target = $region3
    $region8: #{tpu_custom_call.1} parent=1 // loop_exit
      _
    %589 = vsyncpa [#allocation3], 1
    %s590 = scalar_lea.sflag [#allocation3], 1
    %591 = vsyncpa %s590, 1

</llo_original>
